<compile_context>
chip_gen: v7x
topology: tpu7x:2x2x1
jax: 0.10.0
libtpu: 0.0.40
codegen_flags: <defaults>
</compile_context>

<pallas_src>
import math
import functools

import numpy as np
import jax
import jax.numpy as jnp
from jax.experimental import pallas as pl
from jax.experimental.pallas import tpu as pltpu

_HIGHEST = jax.lax.Precision.HIGHEST
_HIGH = jax.lax.Precision.HIGH


# --------------------------------------------------------------------------
# Kernel 1: fused Q/K/V projection (one wide MXU matmul per row tile).
# --------------------------------------------------------------------------
def _qkv_proj_kernel(x_ref, w_ref, b_ref, q_ref, k_ref, v_ref, *, hk, hv):
    # f32 weights -> HIGHEST (projection precision feeds top-k ordering);
    # bf16 weights -> native bf16 MXU with f32 accumulation.
    prec = _HIGHEST if w_ref.dtype == jnp.float32 else None
    xw = jnp.dot(x_ref[0], w_ref[...], preferred_element_type=jnp.float32,
                 precision=prec) + b_ref[...]                   # [tr, 2hk+hv]
    q_ref[0] = xw[:, :hk].astype(q_ref.dtype)
    k_ref[0] = xw[:, hk:2 * hk].astype(k_ref.dtype)
    v_ref[0] = xw[:, 2 * hk:].astype(v_ref.dtype)


def _qkv_projection(x, w, b, *, hk, hv, block_rows, vmem_limit_bytes):
    B, N, dim = x.shape
    tr = min(block_rows, N)
    n_rt = pl.cdiv(N, tr)
    cdt = w.dtype
    out_itemsize = jnp.dtype(cdt).itemsize
    flops = 2 * B * N * dim * (2 * hk + hv)
    bytes_accessed = int(x.size * x.dtype.itemsize
                         + w.size * w.dtype.itemsize + b.size * 4
                         + B * N * (2 * hk + hv) * out_itemsize)
    return pl.pallas_call(
        functools.partial(_qkv_proj_kernel, hk=hk, hv=hv),
        out_shape=(jax.ShapeDtypeStruct((B, N, hk), cdt),
                   jax.ShapeDtypeStruct((B, N, hk), cdt),
                   jax.ShapeDtypeStruct((B, N, hv), cdt)),
        grid_spec=pltpu.PrefetchScalarGridSpec(
            num_scalar_prefetch=0,
            grid=(B, n_rt),
            in_specs=[pl.BlockSpec((1, tr, dim), lambda b_, r: (b_, r, 0)),
                      pl.BlockSpec((dim, 2 * hk + hv), lambda b_, r: (0, 0)),
                      pl.BlockSpec((1, 2 * hk + hv), lambda b_, r: (0, 0))],
            out_specs=(pl.BlockSpec((1, tr, hk), lambda b_, r: (b_, r, 0)),
                       pl.BlockSpec((1, tr, hk), lambda b_, r: (b_, r, 0)),
                       pl.BlockSpec((1, tr, hv), lambda b_, r: (b_, r, 0))),
        ),
        compiler_params=pltpu.CompilerParams(
            dimension_semantics=("parallel", "parallel"),
            vmem_limit_bytes=vmem_limit_bytes),
        cost_estimate=pl.CostEstimate(flops=flops, transcendentals=0,
                                      bytes_accessed=bytes_accessed),
    )(x, w, b)


# --------------------------------------------------------------------------
# Kernel 2: per (batch, query-tile) top-k sparse attention + fused out Linear.
# --------------------------------------------------------------------------
def _topk_attn_kernel(q_ref, k_ref, v_ref, *rest, num_heads, kq_dim, val_dim,
                      k, exact_ties, out_proj):
    if out_proj:
        wo_ref, bo_ref, o_ref = rest
    else:
        (o_ref,) = rest

    bf16 = q_ref.dtype == jnp.bfloat16
    # Scores: exact f32 on the f32 path (top-k ordering must match the
    # reference); native bf16 on the bf16 path.  A@V / output Linear: HIGH
    # (bf16_3x) is plenty -- softmax weights / values need no exact products.
    score_prec = None if bf16 else _HIGHEST
    mm_prec = None if bf16 else _HIGH

    q_all = q_ref[0]                       # [tq, H*kq]   (compute dtype)
    k_all = k_ref[0]                       # [N,  H*kq]
    v_all = v_ref[0]                       # [N,  H*vd]

    tq = q_all.shape[0]
    n_k = k_all.shape[0]
    scale = jnp.float32(1.0 / math.sqrt(kq_dim))
    neg_inf = jnp.float32(-jnp.inf)
    col = (jax.lax.broadcasted_iota(jnp.int32, (tq, n_k), 1)
           if exact_ties else None)

    # NOTE: per-head 8-lane slices off the fused slabs cost XLU shuffles when
    # kq_dim/val_dim < 128; with such small contraction depth the selection
    # loop (VPU/XLU), not the MXU, is the binding unit, so we keep the slabs
    # lane-dense rather than pad each head to 128 lanes.
    y_acc = None            # [tq, dim] f32 accumulator (out_proj path)
    head_outs = []          # head_agg == "none" path
    for h in range(num_heads):
        qh = q_all[:, h * kq_dim:(h + 1) * kq_dim]                 # [tq, kq]
        kh = k_all[:, h * kq_dim:(h + 1) * kq_dim]                 # [N,  kq]
        vh = v_all[:, h * val_dim:(h + 1) * val_dim]               # [N,  vd]

        scores = jax.lax.dot_general(
            qh, kh, (((1,), (1,)), ((), ())),
            preferred_element_type=jnp.float32,
            precision=score_prec) * scale                          # [tq, N]

        # Fused top-k selection + unnormalized weight accumulation.
        # Per step: one XLU max-reduce, one compare, one where-accumulate,
        # one mask pass (2 extra passes with exact_ties).  No stored masks.
        work = scores
        m = wmat = denom = None
        for i in range(k):
            row_max = jnp.max(work, axis=-1, keepdims=True)        # [tq, 1]
            pick = work == row_max                                 # [tq, N]
            if exact_ties:
                first = jnp.min(jnp.where(pick, col, jnp.int32(n_k)),
                                axis=-1, keepdims=True)
                pick = col == first
            if i == 0:
                m = row_max                        # global row max -> e0 = 1
                wmat = pick.astype(jnp.float32)
                denom = jnp.ones_like(row_max)
            else:
                e = jnp.exp(row_max - m)           # e in (0, 1]
                wmat = wmat + jnp.where(pick, e, jnp.float32(0.0))
                denom = denom + e
            if i + 1 < k:
                work = jnp.where(pick, neg_inf, work)

        inv = pl.reciprocal(denom, approx=True)    # EUP
        inv = inv * (2.0 - denom * inv)            # one Newton step -> ~exact

        lhs = wmat.astype(v_all.dtype) if bf16 else wmat
        # Normalize the small [tq, vd] result instead of the [tq, N] weights.
        head_out = jnp.dot(lhs, vh, preferred_element_type=jnp.float32,
                           precision=mm_prec) * inv                # [tq, vd]

        if out_proj:
            # Per-head output-Linear accumulation: lane-dense [tq, dim]
            # result, no [tq, H*vd] concatenate / relayout.
            wo_h = wo_ref[h * val_dim:(h + 1) * val_dim, :]        # [vd, dim]
            contrib = jnp.dot(head_out.astype(wo_h.dtype), wo_h,
                              preferred_element_type=jnp.float32,
                              precision=mm_prec)
            y_acc = contrib if y_acc is None else y_acc + contrib
        else:
            head_outs.append(head_out)

    if out_proj:
        o_ref[0] = (y_acc + bo_ref[...]).astype(o_ref.dtype)
    else:
        o_ref[0] = jnp.concatenate(head_outs, axis=-1).astype(o_ref.dtype)


# --------------------------------------------------------------------------
# Host-side wrappers.
# --------------------------------------------------------------------------
def _default_vmem_limit():
    """Generation-aware scoped-VMEM budget: ~100 MiB on 128-MiB parts
    (v5e/v6e), ~51 MiB on v7x's 64 MiB; conservative fallback otherwise."""
    try:
        cap = int(pltpu.get_tpu_info().vmem_capacity_bytes)
        return min(100 * 1024 * 1024, int(cap * 0.8))
    except Exception:
        return 48 * 1024 * 1024


def prepare_params(params, *, compute_dtype=jnp.float32):
    """One-time repack of the Linear weights into kernel-friendly slabs.
    compute_dtype=bfloat16 enables native-rate bf16 MXU matmuls (f32 accum)."""
    cdt = compute_dtype
    p = {
        "Wqkv": jnp.concatenate([params["Wq"], params["Wk"], params["Wv"]],
                                axis=1).astype(cdt),          # [dim, 2hk+hv]
        "bqkv": jnp.concatenate([params["bq"], params["bk"], params["bv"]]
                                ).reshape(1, -1).astype(jnp.float32),
    }
    if "Wo" in params:
        p["Wo"] = params["Wo"].astype(cdt)                    # [hv, dim]
        p["bo"] = params["bo"].reshape(1, -1).astype(jnp.float32)
    return p


def sparse_attention_forward(x, prepared, *, num_heads, kq_dim, val_dim, k,
                             head_agg="Linear", block_q=256, block_rows=256,
                             exact_ties=None, out_dtype=jnp.float32,
                             vmem_limit_bytes=None,
                             single_buffer_invariants=False):
    """x: [B, N, dim] -> [B, N, dim] (Linear head agg) or [B, N, H*vd]."""
    B, N, dim = x.shape
    assert k <= N, "k must not exceed the number of nodes"
    hk = num_heads * kq_dim
    hv = num_heads * val_dim
    out_proj = head_agg == "Linear"
    if not out_proj:
        assert head_agg in ("none", "None", None)
        assert dim == hv, "head_agg='none' requires dim == num_heads*val_dim"

    cdt = prepared["Wqkv"].dtype
    bf16 = cdt == jnp.bfloat16
    if exact_ties is None:
        # Coarser bf16 scores tie more often; force first-index tie-breaking
        # there so the effective top-k set matches argKmin semantics.
        exact_ties = bool(bf16)
    if vmem_limit_bytes is None:
        vmem_limit_bytes = _default_vmem_limit()

    # ---- Q/K/V projection: once per row, never recomputed per query tile.
    x_c = x.astype(cdt)
    q_all, k_all, v_all = _qkv_projection(
        x_c, prepared["Wqkv"], prepared["bqkv"], hk=hk, hv=hv,
        block_rows=block_rows, vmem_limit_bytes=vmem_limit_bytes)

    # ---- Attention over query tiles.
    tq = min(block_q, N)
    n_qt = pl.cdiv(N, tq)
    out_dim = dim if out_proj else hv

    def _spec(shape, index_map, invariant=False):
        # Grid-invariant inputs (k/v slabs within a batch, weights) can be
        # single-buffered to halve their VMEM footprint on v7x (64 MiB).
        if invariant and single_buffer_invariants:
            try:
                return pl.BlockSpec(shape, index_map,
                                    pipeline_mode=pl.Buffered(1))
            except Exception:
                pass
        return pl.BlockSpec(shape, index_map)

    in_specs = [
        pl.BlockSpec((1, tq, hk), lambda b, qi: (b, qi, 0)),     # query tile
        _spec((1, N, hk), lambda b, qi: (b, 0, 0), invariant=True),  # keys
        _spec((1, N, hv), lambda b, qi: (b, 0, 0), invariant=True),  # values
    ]
    args = [q_all, k_all, v_all]
    if out_proj:
        in_specs += [_spec((hv, dim), lambda b, qi: (0, 0), invariant=True),
                     _spec((1, dim), lambda b, qi: (0, 0), invariant=True)]
        args += [prepared["Wo"], prepared["bo"]]

    rows = n_qt * tq
    flops = (2 * B * num_heads * rows * N * (kq_dim + val_dim)     # scores+AV
             + (2 * B * rows * hv * dim if out_proj else 0))       # out Linear
    weight_bytes = sum(int(np.prod(a.shape)) * a.dtype.itemsize
                       for a in args[3:])
    bytes_accessed = int(q_all.size * q_all.dtype.itemsize
                         + k_all.size * k_all.dtype.itemsize
                         + v_all.size * v_all.dtype.itemsize
                         + weight_bytes
                         + B * N * out_dim * jnp.dtype(out_dtype).itemsize)
    cost = pl.CostEstimate(flops=flops,
                           transcendentals=B * num_heads * rows * k,
                           bytes_accessed=bytes_accessed)

    kernel = functools.partial(
        _topk_attn_kernel, num_heads=num_heads, kq_dim=kq_dim,
        val_dim=val_dim, k=k, exact_ties=exact_ties, out_proj=out_proj)

    return pl.pallas_call(
        kernel,
        out_shape=jax.ShapeDtypeStruct((B, N, out_dim), out_dtype),
        grid_spec=pltpu.PrefetchScalarGridSpec(
            num_scalar_prefetch=0,
            grid=(B, n_qt),
            in_specs=in_specs,
            out_specs=pl.BlockSpec((1, tq, out_dim),
                                   lambda b, qi: (b, qi, 0)),
        ),
        compiler_params=pltpu.CompilerParams(
            dimension_semantics=("parallel", "parallel"),
            vmem_limit_bytes=vmem_limit_bytes),
        cost_estimate=cost,
    )(*args)


# --------------------------------------------------------------------------
# Pure-JAX reference mirroring the PyTorch forward.
# --------------------------------------------------------------------------
def ref_forward(x, params, *, num_heads, kq_dim, val_dim, k, head_agg="Linear"):
    B, N, dim = x.shape
    P = _HIGHEST
    q = jnp.dot(x, params["Wq"], precision=P) + params["bq"]
    kk = jnp.dot(x, params["Wk"], precision=P) + params["bk"]
    v = jnp.dot(x, params["Wv"], precision=P) + params["bv"]

    def split(t, d):
        return t.reshape(B, N, num_heads, d).transpose(0, 2, 1, 3)

    q, kk, v = split(q, kq_dim), split(kk, kq_dim), split(v, val_dim)
    scores = jnp.einsum("bhnd,bhmd->bhnm", q, kk,
                        precision=P) / math.sqrt(kq_dim)
    top_vals, top_idx = jax.lax.top_k(scores, k)                 # [B,H,N,k]
    w = jax.nn.softmax(top_vals, axis=-1)

    v_exp = jnp.broadcast_to(v[:, :, None, :, :],
                             (B, num_heads, N, N, val_dim))
    idx_exp = jnp.broadcast_to(top_idx[..., None],
                               (B, num_heads, N, k, val_dim))
    gathered = jnp.take_along_axis(v_exp, idx_exp, axis=3)       # [B,H,N,k,vd]
    out = jnp.sum(w[..., None] * gathered, axis=-2)              # [B,H,N,vd]

    combined = out.transpose(0, 2, 1, 3).reshape(B, N, num_heads * val_dim)
    if head_agg == "Linear":
        return jnp.dot(combined, params["Wo"], precision=P) + params["bo"]
    return combined


if __name__ == "__main__":
    B, N, dim = 2, 16, 32
    num_heads, kq_dim, val_dim, k = 4, 8, 8, 4

    key = jax.random.PRNGKey(0)
    keys = jax.random.split(key, 9)
    x = jax.random.normal(keys[0], (B, N, dim), jnp.float32)

    def linear_init(kw, kb, fan_in, fan_out):
        bound = 1.0 / math.sqrt(fan_in)
        W = jax.random.uniform(kw, (fan_in, fan_out), jnp.float32, -bound, bound)
        b = jax.random.uniform(kb, (fan_out,), jnp.float32, -bound, bound)
        return W, b

    Wq, bq = linear_init(keys[1], keys[2], dim, num_heads * kq_dim)
    Wk, bk = linear_init(keys[3], keys[4], dim, num_heads * kq_dim)
    Wv, bv = linear_init(keys[5], keys[6], dim, num_heads * val_dim)
    Wo, bo = linear_init(keys[7], keys[8], num_heads * val_dim, dim)
    params = dict(Wq=Wq, bq=bq, Wk=Wk, bk=bk, Wv=Wv, bv=bv, Wo=Wo, bo=bo)

    common = dict(num_heads=num_heads, kq_dim=kq_dim, val_dim=val_dim, k=k)

    # f32 path (fast single-reduce top-k) vs reference.
    ref = ref_forward(x, params, head_agg="Linear", **common)
    prepared = prepare_params(params)
    out = sparse_attention_forward(x, prepared, head_agg="Linear", **common)
    out = jax.block_until_ready(out)
    np.testing.assert_allclose(np.asarray(out), np.asarray(ref),
                               rtol=1e-4, atol=1e-4)

    # f32 path with exact first-index tie-breaking (argKmin semantics on ties).
    out_exact = sparse_attention_forward(x, prepared, head_agg="Linear",
                                         exact_ties=True, **common)
    out_exact = jax.block_until_ready(out_exact)
    np.testing.assert_allclose(np.asarray(out_exact), np.asarray(ref),
                               rtol=1e-4, atol=1e-4)

    # head_agg = "none" path (dim == num_heads * val_dim here).
    ref_none = ref_forward(x, params, head_agg="none", **common)
    out_none = sparse_attention_forward(x, prepared, head_agg="none", **common)
    out_none = jax.block_until_ready(out_none)
    np.testing.assert_allclose(np.asarray(out_none), np.asarray(ref_none),
                               rtol=1e-4, atol=1e-4)

    # bf16-input / f32-accumulate path (native MXU rate on v6e/v7x).  Top-k
    # membership can legitimately differ from the f32 reference near ties, so
    # only sanity-check shape / finiteness here; exact_ties defaults to True
    # on this path.
    prepared_bf16 = prepare_params(params, compute_dtype=jnp.bfloat16)
    out_bf16 = sparse_attention_forward(x, prepared_bf16, head_agg="Linear",
                                        **common)
    out_bf16 = jax.block_until_ready(out_bf16)
    assert out_bf16.shape == ref.shape
    assert bool(jnp.all(jnp.isfinite(out_bf16)))

    # TODO(synk): random_attention=True path (torch.randperm subsampling of
    # keys/values) is host-side RNG data selection and is not implemented.
    print("KERNEL_OK")
</pallas_src>

<mosaic_0001>
module attributes {stable_mosaic.version = 11 : i64} {
  func.func @_qkv_proj_kernel(%arg0: i32, %arg1: i32, %arg2: memref<1x16x32xf32, #tpu.memory_space<vmem>>, %arg3: memref<32x96xf32, #tpu.memory_space<vmem>>, %arg4: memref<1x96xf32, #tpu.memory_space<vmem>>, %arg5: memref<1x16x32xf32, #tpu.memory_space<vmem>>, %arg6: memref<1x16x32xf32, #tpu.memory_space<vmem>>, %arg7: memref<1x16x32xf32, #tpu.memory_space<vmem>>) attributes {dimension_semantics = [#tpu.dimension_semantics<parallel>, #tpu.dimension_semantics<parallel>], iteration_bounds = array<i64: 2, 1>, scalar_prefetch = 0 : i64, scratch_operands = 0 : i64, tpu.core_type = #tpu.core_type<tc>, window_params = [{transform_indices = @transform_0, window_bounds = array<i64: 1, 16, 32>}, {pipeline_mode = #tpu.pipeline_mode<synchronous>, transform_indices = @transform_1, window_bounds = array<i64: 32, 96>}, {pipeline_mode = #tpu.pipeline_mode<synchronous>, transform_indices = @transform_2, window_bounds = array<i64: 1, 96>}, {transform_indices = @transform_3, window_bounds = array<i64: 1, 16, 32>}, {transform_indices = @transform_4, window_bounds = array<i64: 1, 16, 32>}, {transform_indices = @transform_5, window_bounds = array<i64: 1, 16, 32>}]} {
    %c0 = arith.constant 0 : index
    %c0_0 = arith.constant 0 : index
    %c0_1 = arith.constant 0 : index
    %0 = vector.load %arg2[%c0, %c0_0, %c0_1] : memref<1x16x32xf32, #tpu.memory_space<vmem>>, vector<1x16x32xf32>
    %1 = vector.shape_cast %0 : vector<1x16x32xf32> to vector<16x32xf32>
    %c0_2 = arith.constant 0 : index
    %c0_3 = arith.constant 0 : index
    %2 = vector.load %arg3[%c0_2, %c0_3] : memref<32x96xf32, #tpu.memory_space<vmem>>, vector<32x96xf32>
    %cst = arith.constant dense<0.000000e+00> : vector<16x96xf32>
    %3 = tpu.matmul %1, %2, %cst {dimension_numbers = #tpu.dot_dimension_numbers<[1], [0], [0], [1], [0, 0, 1, 1], [], []>, precision = #tpu.contract_precision<fp32>} : vector<16x32xf32>, vector<32x96xf32>, vector<16x96xf32> -> vector<16x96xf32>
    %c0_4 = arith.constant 0 : index
    %c0_5 = arith.constant 0 : index
    %4 = vector.load %arg4[%c0_4, %c0_5] : memref<1x96xf32, #tpu.memory_space<vmem>>, vector<1x96xf32>
    %5 = vector.broadcast %4 : vector<1x96xf32> to vector<16x96xf32>
    %6 = arith.addf %3, %5 : vector<16x96xf32>
    %7 = vector.extract_strided_slice %6 {offsets = [0, 0], sizes = [16, 32], strides = [1, 1]} : vector<16x96xf32> to vector<16x32xf32>
    %c0_6 = arith.constant 0 : index
    %c0_7 = arith.constant 0 : index
    %c0_8 = arith.constant 0 : index
    %8 = vector.load %arg5[%c0_6, %c0_7, %c0_8] : memref<1x16x32xf32, #tpu.memory_space<vmem>>, vector<1x16x32xf32>
    %9 = vector.shape_cast %8 : vector<1x16x32xf32> to vector<16x32xf32>
    %10 = vector.shape_cast %7 : vector<16x32xf32> to vector<1x16x32xf32>
    tpu.vector_store %arg5[%c0_6, %c0_7, %c0_8], %10 {strides = array<i32>} : memref<1x16x32xf32, #tpu.memory_space<vmem>>, vector<1x16x32xf32>,
    %11 = vector.extract_strided_slice %6 {offsets = [0, 32], sizes = [16, 32], strides = [1, 1]} : vector<16x96xf32> to vector<16x32xf32>
    %c0_9 = arith.constant 0 : index
    %c0_10 = arith.constant 0 : index
    %c0_11 = arith.constant 0 : index
    %12 = vector.load %arg6[%c0_9, %c0_10, %c0_11] : memref<1x16x32xf32, #tpu.memory_space<vmem>>, vector<1x16x32xf32>
    %13 = vector.shape_cast %12 : vector<1x16x32xf32> to vector<16x32xf32>
    %14 = vector.shape_cast %11 : vector<16x32xf32> to vector<1x16x32xf32>
    tpu.vector_store %arg6[%c0_9, %c0_10, %c0_11], %14 {strides = array<i32>} : memref<1x16x32xf32, #tpu.memory_space<vmem>>, vector<1x16x32xf32>,
    %15 = vector.extract_strided_slice %6 {offsets = [0, 64], sizes = [16, 32], strides = [1, 1]} : vector<16x96xf32> to vector<16x32xf32>
    %c0_12 = arith.constant 0 : index
    %c0_13 = arith.constant 0 : index
    %c0_14 = arith.constant 0 : index
    %16 = vector.load %arg7[%c0_12, %c0_13, %c0_14] : memref<1x16x32xf32, #tpu.memory_space<vmem>>, vector<1x16x32xf32>
    %17 = vector.shape_cast %16 : vector<1x16x32xf32> to vector<16x32xf32>
    %18 = vector.shape_cast %15 : vector<16x32xf32> to vector<1x16x32xf32>
    tpu.vector_store %arg7[%c0_12, %c0_13, %c0_14], %18 {strides = array<i32>} : memref<1x16x32xf32, #tpu.memory_space<vmem>>, vector<1x16x32xf32>,
    return
  }
  func.func @transform_0(%arg0: i32, %arg1: i32) -> (i32, i32, i32) {
    %c0_i32 = arith.constant 0 : i32
    %c0_i32_0 = arith.constant 0 : i32
    return %arg0, %arg1, %c0_i32 : i32, i32, i32
  }
  func.func @transform_1(%arg0: i32, %arg1: i32) -> (i32, i32) {
    %c0_i32 = arith.constant 0 : i32
    %c0_i32_0 = arith.constant 0 : i32
    %c0_i32_1 = arith.constant 0 : i32
    return %c0_i32, %c0_i32_0 : i32, i32
  }
  func.func @transform_2(%arg0: i32, %arg1: i32) -> (i32, i32) {
    %c0_i32 = arith.constant 0 : i32
    %c0_i32_0 = arith.constant 0 : i32
    %c0_i32_1 = arith.constant 0 : i32
    return %c0_i32, %c0_i32_0 : i32, i32
  }
  func.func @transform_3(%arg0: i32, %arg1: i32) -> (i32, i32, i32) {
    %c0_i32 = arith.constant 0 : i32
    %c0_i32_0 = arith.constant 0 : i32
    return %arg0, %arg1, %c0_i32 : i32, i32, i32
  }
  func.func @transform_4(%arg0: i32, %arg1: i32) -> (i32, i32, i32) {
    %c0_i32 = arith.constant 0 : i32
    %c0_i32_0 = arith.constant 0 : i32
    return %arg0, %arg1, %c0_i32 : i32, i32, i32
  }
  func.func @transform_5(%arg0: i32, %arg1: i32) -> (i32, i32, i32) {
    %c0_i32 = arith.constant 0 : i32
    %c0_i32_0 = arith.constant 0 : i32
    return %arg0, %arg1, %c0_i32 : i32, i32, i32
  }
}

</mosaic_0001>

<llo_original>
// kernel: tpu_custom_call.1
$region0: #{tpu_custom_call.1}
  #allocation0 [shape = 'u32[]', space=smem, size = 0x4, offset = 0x4, fixed_abs, tag = 'smem constant byte address 0x4 - core index']
  #allocation1 [shape = 'u32[144,128]{1,0:T(1,128)}', space=vmem, size = 0x12000, scoped, tag = 'internal scratch']
  %s0 = inlined_call_operand.hbm [shape: f32[2,16,32], index: 0, kind: input, shape index: {}]
  %s1 = inlined_call_operand.hbm [shape: f32[32,96], index: 1, kind: input, shape index: {}]
  %s2 = inlined_call_operand.vmem [shape: f32[1,96], index: 2, kind: input, shape index: {}]
  %s3 = inlined_call_operand.hbm [shape: f32[2,16,32], index: 3, kind: output, shape index: {0}]
  %s4 = inlined_call_operand.hbm [shape: f32[2,16,32], index: 4, kind: output, shape index: {1}]
  %s5 = inlined_call_operand.hbm [shape: f32[2,16,32], index: 5, kind: output, shape index: {2}]
  %6 = xla_tuple %s3, %s4, %s5
  %s7 = sld [smem:[#allocation0]]
  $region69: #{tpu_custom_call.1} parent=0
    _
  %s9 = ssub.s32 1, %s7
  %s10 = scalar_select 0, %s9, %s7
  $region1: #{tpu_custom_call.1} parent=0
    #allocation2 [shape = 'u8[16384]{0}', space=vmem, size = 0x4000, scoped, tag = 'input window, operand 0']
    #allocation3 [shape = 's32[2]{0}', space=sflag, size = 0x8, scoped, tag = 'scoped memory for tpu_custom_call.1']
    #allocation4 [shape = 's32[2]{0}', space=sflag, size = 0x8, scoped, tag = 'scoped memory for tpu_custom_call.1']
    #allocation5 [shape = 'u8[16384]{0}', space=vmem, size = 0x4000, scoped, tag = 'input window, operand 1, single buffered']
    #allocation6 [shape = 's32[1]{0}', space=sflag, size = 0x4, scoped, tag = 'scoped memory for tpu_custom_call.1']
    #allocation7 [shape = 'u8[16384]{0}', space=vmem, size = 0x4000, scoped, tag = 'output window, operand 0']
    #allocation8 [shape = 'u8[16384]{0}', space=vmem, size = 0x4000, scoped, tag = 'output window, operand 1']
    #allocation9 [shape = 's32[2]{0}', space=sflag, size = 0x8, scoped, tag = 'scoped memory for tpu_custom_call.1']
    #allocation10 [shape = 'u8[16384]{0}', space=vmem, size = 0x4000, scoped, tag = 'output window, operand 2']
    %11 = vsyncpa [#allocation3], 0
    %s12 = scalar_lea.sflag [#allocation3], 1
    %13 = vsyncpa %s12, 0
    %14 = vsyncpa [#allocation6], 0
    %15 = vsyncpa [#allocation4], 0
    %s16 = scalar_lea.sflag [#allocation4], 1
    %17 = vsyncpa %s16, 0
    %18 = vsyncpa [#allocation9], 0
    %s19 = scalar_lea.sflag [#allocation9], 1
    %20 = vsyncpa %s19, 0
    loop: start=0, step=1, limit=4
    $region2: #{tpu_custom_call.1} parent=1 // loop_pre_header
      _
    $region3: #{tpu_custom_call.1} parent=1 // loop_header
      %s22 = sphi 0, %s26
      %p23 = scmp.ge.s32.totalorder %s22, 4
      %s29 = sphi 0, %s41
      %s30 = sphi 0, %s37
      %s31 = sphi 0, %s29
      %s32 = sphi 0, %s30
      %s33 = sphi 0, %s31
      %s34 = sphi 0, %s32
      %s46 = sphi 0, %s48
      %s49 = sphi 0, %s46
      %s50 = sphi 0, %s49
      %s66 = sphi 0, %s50
      %s70 = sphi 0, %s70
      %s72 = sphi 0, %s70
      %s73 = sphi 0, %s72
      %s87 = sphi 0, %s73
      %s91 = sphi 0, %s91
      %s93 = sphi 0, %s91
      %s94 = sphi 0, %s93
      %s108 = sphi 0, %s94
      %s116 = sphi 0, %s118
      %s119 = sphi 0, %s116
      %s120 = sphi 0, %s119
      %s136 = sphi 0, %s120
      %s144 = sphi 0, %s146
      %s147 = sphi 0, %s144
      %s148 = sphi 0, %s147
      %s164 = sphi 0, %s148
      %s172 = sphi 0, %s174
      %s175 = sphi 0, %s172
      %s176 = sphi 0, %s175
      %s192 = sphi 0, %s176
    $region4: #{tpu_custom_call.1} parent=1 // loop_header_branch
      %25 = sbr.rel (%p23) target = $region8
    $region5: #{tpu_custom_call.1} parent=1 // loop_body
      %s27 = ssub.s32 %s22, 1
      %s28 = ssub.s32 %s22, 2
      %s35 = sadd.s32 1, %s30
      %p36 = scmp.ge.s32.totalorder %s35, 1
      %s37 = scalar_select %p36, 0, %s35
      %s38 = sadd.s32 1, %s29
      %s39 = scalar_select %p36, %s38, %s29
      %p40 = scmp.ge.s32.totalorder %s39, 2
      %s41 = scalar_select %p40, 0, %s39
      %s42 = ssub.s32 %s29, %s41
      %s43 = ssub.s32 %s30, %s37
      %s44 = sor.u32 %s42, %s43
      %p45 = scmp.eq.s32.totalorder %s44, 0
      %s47 = sadd.s32 %s46, 1
      %s48 = scalar_select %p45, %s46, %s47
      %p51 = pneg %p45
      %p52 = scmp.eq.s32.totalorder %s22, 1
      %p53 = por %p51, %p52
      %p54 = scmp.ne.s32.totalorder %s46, %s49
      %p55 = scmp.eq.s32.totalorder %s22, 0
      %p56 = por %p54, %p55
      %p57 = scmp.ne.s32.totalorder %s46, %s49
      %p58 = scmp.eq.s32.totalorder %s27, 1
      %p59 = por %p57, %p58
      %p60 = scmp.ne.s32.totalorder %s49, %s50
      %p61 = scmp.eq.s32.totalorder %s27, 0
      %p62 = por %p60, %p61
      %p63 = scmp.ne.s32.totalorder %s49, %s50
      %p64 = scmp.eq.s32.totalorder %s28, 1
      %p65 = por %p63, %p64
      %p67 = scmp.ne.s32.totalorder %s50, %s66
      %p68 = scmp.eq.s32.totalorder %s28, 0
      %p69 = por %p67, %p68
      %s71 = sadd.s32 %s70, 1
      %p74 = scmp.eq.s32.totalorder %s22, 1
      %p75 = scmp.ne.s32.totalorder %s70, %s72
      %p76 = scmp.eq.s32.totalorder %s22, 0
      %p77 = por %p75, %p76
      %p78 = scmp.ne.s32.totalorder %s70, %s72
      %p79 = scmp.eq.s32.totalorder %s27, 1
      %p80 = por %p78, %p79
      %p81 = scmp.ne.s32.totalorder %s72, %s73
      %p82 = scmp.eq.s32.totalorder %s27, 0
      %p83 = por %p81, %p82
      %p84 = scmp.ne.s32.totalorder %s72, %s73
      %p85 = scmp.eq.s32.totalorder %s28, 1
      %p86 = por %p84, %p85
      %p88 = scmp.ne.s32.totalorder %s73, %s87
      %p89 = scmp.eq.s32.totalorder %s28, 0
      %p90 = por %p88, %p89
      %s92 = sadd.s32 %s91, 1
      %p95 = scmp.eq.s32.totalorder %s22, 1
      %p96 = scmp.ne.s32.totalorder %s91, %s93
      %p97 = scmp.eq.s32.totalorder %s22, 0
      %p98 = por %p96, %p97
      %p99 = scmp.ne.s32.totalorder %s91, %s93
      %p100 = scmp.eq.s32.totalorder %s27, 1
      %p101 = por %p99, %p100
      %p102 = scmp.ne.s32.totalorder %s93, %s94
      %p103 = scmp.eq.s32.totalorder %s27, 0
      %p104 = por %p102, %p103
      %p105 = scmp.ne.s32.totalorder %s93, %s94
      %p106 = scmp.eq.s32.totalorder %s28, 1
      %p107 = por %p105, %p106
      %p109 = scmp.ne.s32.totalorder %s94, %s108
      %p110 = scmp.eq.s32.totalorder %s28, 0
      %p111 = por %p109, %p110
      %s112 = ssub.s32 %s29, %s41
      %s113 = ssub.s32 %s30, %s37
      %s114 = sor.u32 %s112, %s113
      %p115 = scmp.eq.s32.totalorder %s114, 0
      %s117 = sadd.s32 %s116, 1
      %s118 = scalar_select %p115, %s116, %s117
      %p121 = pneg %p115
      %p122 = scmp.eq.s32.totalorder %s22, 1
      %p123 = por %p121, %p122
      %p124 = scmp.ne.s32.totalorder %s116, %s119
      %p125 = scmp.eq.s32.totalorder %s22, 0
      %p126 = por %p124, %p125
      %p127 = scmp.ne.s32.totalorder %s116, %s119
      %p128 = scmp.eq.s32.totalorder %s27, 1
      %p129 = por %p127, %p128
      %p130 = scmp.ne.s32.totalorder %s119, %s120
      %p131 = scmp.eq.s32.totalorder %s27, 0
      %p132 = por %p130, %p131
      %p133 = scmp.ne.s32.totalorder %s119, %s120
      %p134 = scmp.eq.s32.totalorder %s28, 1
      %p135 = por %p133, %p134
      %p137 = scmp.ne.s32.totalorder %s120, %s136
      %p138 = scmp.eq.s32.totalorder %s28, 0
      %p139 = por %p137, %p138
      %s140 = ssub.s32 %s29, %s41
      %s141 = ssub.s32 %s30, %s37
      %s142 = sor.u32 %s140, %s141
      %p143 = scmp.eq.s32.totalorder %s142, 0
      %s145 = sadd.s32 %s144, 1
      %s146 = scalar_select %p143, %s144, %s145
      %p149 = pneg %p143
      %p150 = scmp.eq.s32.totalorder %s22, 1
      %p151 = por %p149, %p150
      %p152 = scmp.ne.s32.totalorder %s144, %s147
      %p153 = scmp.eq.s32.totalorder %s22, 0
      %p154 = por %p152, %p153
      %p155 = scmp.ne.s32.totalorder %s144, %s147
      %p156 = scmp.eq.s32.totalorder %s27, 1
      %p157 = por %p155, %p156
      %p158 = scmp.ne.s32.totalorder %s147, %s148
      %p159 = scmp.eq.s32.totalorder %s27, 0
      %p160 = por %p158, %p159
      %p161 = scmp.ne.s32.totalorder %s147, %s148
      %p162 = scmp.eq.s32.totalorder %s28, 1
      %p163 = por %p161, %p162
      %p165 = scmp.ne.s32.totalorder %s148, %s164
      %p166 = scmp.eq.s32.totalorder %s28, 0
      %p167 = por %p165, %p166
      %s168 = ssub.s32 %s29, %s41
      %s169 = ssub.s32 %s30, %s37
      %s170 = sor.u32 %s168, %s169
      %p171 = scmp.eq.s32.totalorder %s170, 0
      %s173 = sadd.s32 %s172, 1
      %s174 = scalar_select %p171, %s172, %s173
      %p177 = pneg %p171
      %p178 = scmp.eq.s32.totalorder %s22, 1
      %p179 = por %p177, %p178
      %p180 = scmp.ne.s32.totalorder %s172, %s175
      %p181 = scmp.eq.s32.totalorder %s22, 0
      %p182 = por %p180, %p181
      %p183 = scmp.ne.s32.totalorder %s172, %s175
      %p184 = scmp.eq.s32.totalorder %s27, 1
      %p185 = por %p183, %p184
      %p186 = scmp.ne.s32.totalorder %s175, %s176
      %p187 = scmp.eq.s32.totalorder %s27, 0
      %p188 = por %p186, %p187
      %p189 = scmp.ne.s32.totalorder %s175, %s176
      %p190 = scmp.eq.s32.totalorder %s28, 1
      %p191 = por %p189, %p190
      %p193 = scmp.ne.s32.totalorder %s176, %s192
      %p194 = scmp.eq.s32.totalorder %s28, 0
      %p195 = por %p193, %p194
      %p196 = scmp.le.s32.totalorder 1, %s22
      %p197 = scmp.lt.s32.totalorder %s22, 3
      %p198 = pnand %p196, %p197
      %p199 = pneg %p198
      // Predicated region
      $region9: #{tpu_custom_call.1} parent=5 // pred_check
        _
      $region10: #{tpu_custom_call.1} parent=5 // pred_check_branch
        %201 = sbr.rel (%p198) target = $region12
      $region11: #{tpu_custom_call.1} parent=5 // pred_region
        %s202 = ssub.s32 %s22, 1
        // Predicated region
        $region13: #{tpu_custom_call.1} parent=11 // pred_check
          %p203 = pneg %p83
        $region14: #{tpu_custom_call.1} parent=11 // pred_check_branch
          %205 = sbr.rel (%p203) target = $region16
        $region15: #{tpu_custom_call.1} parent=11 // pred_region
          %s207 = ssub.s32 512, 512
          %208 = vsyncadd [#allocation6], %s207
          %s209 = sshll.u32 [#allocation5], 4
          %s210 = int_to_ptr.vmem [resolvable:$true] %s209
          %215 = dma.hbm_to_vmem [thread:$0]  %s1, 512, %s210, [#allocation6], 128, 128, 8
        $region16: #{tpu_custom_call.1} parent=11 // pred_fallthru
          _
        // Predicated region
        $region17: #{tpu_custom_call.1} parent=11 // pred_check
          %p216 = pneg %p104
        $region18: #{tpu_custom_call.1} parent=11 // pred_check_branch
          %218 = sbr.rel (%p216) target = $region20
        $region19: #{tpu_custom_call.1} parent=11 // pred_region
          _
        $region20: #{tpu_custom_call.1} parent=11 // pred_fallthru
          _
      $region12: #{tpu_custom_call.1} parent=5 // pred_fallthru
        _
      %p219 = scmp.lt.s32.totalorder %s22, 2
      // Predicated region
      $region21: #{tpu_custom_call.1} parent=5 // pred_check
        %p220 = pneg %p219
      $region22: #{tpu_custom_call.1} parent=5 // pred_check_branch
        %222 = sbr.rel (%p220) target = $region24
      $region23: #{tpu_custom_call.1} parent=5 // pred_region
        // Predicated region
        $region25: #{tpu_custom_call.1} parent=23 // pred_check
          %p223 = pneg %p56
        $region26: #{tpu_custom_call.1} parent=23 // pred_check_branch
          %225 = sbr.rel (%p223) target = $region28
        $region27: #{tpu_custom_call.1} parent=23 // pred_region
          %s226 = sand.u32 %s46, 1
          %s227 = scalar_lea.sflag [#allocation3], %s226
          %s228 = sand.u32 %s46, 1
          %s229 = smul.addr %s228, 16
          %s230 = scalar_lea.vmem [#allocation2], %s229
          %s231 = smul.u32 2, %s30
          %s233 = ssub.s32 256, 256
          %234 = vsyncadd %s227, %s233
          %s235 = smul.addr %s29, 2
          %s236 = sadd.s32 %s231, %s235
          %s237 = smul.addr %s236, 128
          %s238 = scalar_lea.hbm %s0, %s237
          %s239 = sshll.u32 %s230, 4
          %s240 = int_to_ptr.vmem [resolvable:$true] %s239
          %245 = dma.hbm_to_vmem [thread:$0]  %s238, 256, %s240, %s227, 128, 128, 8
        $region28: #{tpu_custom_call.1} parent=23 // pred_fallthru
          _
      $region24: #{tpu_custom_call.1} parent=5 // pred_fallthru
        _
      %p246 = scmp.le.s32.totalorder 1, %s22
      %p247 = scmp.lt.s32.totalorder %s22, 3
      %p248 = pnand %p246, %p247
      %p249 = pneg %p248
      // Predicated region
      $region29: #{tpu_custom_call.1} parent=5 // pred_check
        _
      $region30: #{tpu_custom_call.1} parent=5 // pred_check_branch
        %251 = sbr.rel (%p248) target = $region32
      $region31: #{tpu_custom_call.1} parent=5 // pred_region
        %s252 = ssub.s32 %s22, 1
        %s253 = sand.u32 %s49, 1
        %s254 = scalar_lea.sflag [#allocation3], %s253
        %s255 = sand.u32 %s49, 1
        %s256 = smul.addr %s255, 16
        %s257 = scalar_lea.vmem [#allocation2], %s256
        // Predicated region
        $region33: #{tpu_custom_call.1} parent=31 // pred_check
          %p258 = pneg %p62
        $region34: #{tpu_custom_call.1} parent=31 // pred_check_branch
          %260 = sbr.rel (%p258) target = $region36
        $region35: #{tpu_custom_call.1} parent=31 // pred_region
          %261 = dma.done %s254, 256
        $region36: #{tpu_custom_call.1} parent=31 // pred_fallthru
          _
        // Predicated region
        $region37: #{tpu_custom_call.1} parent=31 // pred_check
          %p262 = pneg %p83
        $region38: #{tpu_custom_call.1} parent=31 // pred_check_branch
          %264 = sbr.rel (%p262) target = $region40
        $region39: #{tpu_custom_call.1} parent=31 // pred_region
          %265 = dma.done [#allocation6], 512
        $region40: #{tpu_custom_call.1} parent=31 // pred_fallthru
          _
        %s266 = sand.u32 %s49, 1
        %s267 = scalar_lea.sflag [#allocation3], %s266
        %s268 = sand.u32 %s49, 1
        %s269 = smul.addr %s268, 16
        %s270 = scalar_lea.vmem [#allocation2], %s269
        %p271 = pneg %p62
        %p272 = pneg %p59
        %p273 = pneg %p83
        %p274 = pneg %p80
        %p275 = pneg %p104
        %p276 = pneg %p101
        %p277 = pneg %p132
        %p278 = pneg %p129
        %s279 = sand.u32 %s119, 1
        %s280 = scalar_lea.sflag [#allocation4], %s279
        %s281 = sand.u32 %s119, 1
        %s282 = smul.addr %s281, 16
        %s283 = scalar_lea.vmem [#allocation7], %s282
        %p284 = pneg %p160
        %p285 = pneg %p157
        %s286 = sand.u32 %s27, 1
        %s287 = scalar_lea.sflag [#allocation9], %s286
        %s288 = sand.u32 %s147, 1
        %s289 = smul.addr %s288, 16
        %s290 = scalar_lea.vmem [#allocation8], %s289
        %p291 = pneg %p188
        %p292 = pneg %p185
        %s293 = sand.u32 %s27, 1
        %s294 = scalar_lea.sflag [#allocation9], %s293
        %s295 = sand.u32 %s175, 1
        %s296 = smul.addr %s295, 16
        %s297 = scalar_lea.vmem [#allocation10], %s296
        %s298 = smul.u32 2, %s32
        %s299 = smul.u32 2, %s32
        %s300 = smul.u32 2, %s32
        %s301 = smul.u32 2, %s32
        %v302 = vld [vmem:[%s257] sm:$0xff]
        %v303 = vld [vmem:[%s257 + $0x8] sm:$0xff]
        %v304 = vld [vmem:[#allocation5] sm:$0xff]
        %v305 = vld [vmem:[#allocation5 + $0x8] sm:$0xff]
        %v306 = vld [vmem:[#allocation5 + $0x10] sm:$0xff]
        %v307 = vld [vmem:[#allocation5 + $0x18] sm:$0xff]
        %v308 = vld [vmem:[%s2] sm:$0x1]
        %v310 = vlaneseq
        %v311 = vshrl.u32 %v310, 7
        %v312 = vsub.s32 0, %v311
        %v313 = vrot.slane %v308, %v312
        %vm315 = vcmask 261120
        %v317 = vsel %vm315, %v302, 0
        %v320 = vsel %vm315, %v303, 0
        %322 = vmatprep.subr.mxu0 0.0
        %v323 = vand.u32 %v304, 4294901760
        %324 = vmatpush1.msra.mxu0 %v323
        %325 = vmatprep.subr.mxu0 0.0
        %v326 = vand.u32 %v305, 4294901760
        %327 = vmatpush1.msra.mxu0 %v326
        %328 = vmatprep.subr.mxu0 0.0
        %v329 = vand.u32 %v306, 4294901760
        %330 = vmatpush1.msra.mxu0 %v329
        %331 = vmatprep.subr.mxu0 0.0
        %v332 = vand.u32 %v307, 4294901760
        %333 = vmatpush1.msra.mxu0 %v332
        %334 = vmatprep.subr.mxu0 0.0
        %335 = vmatpush1.msra.mxu0 0.0
        %336 = vmatprep.subr.mxu0 0.0
        %337 = vmatpush1.msra.mxu0 0.0
        %338 = vmatprep.subr.mxu0 0.0
        %339 = vmatpush1.msra.mxu0 0.0
        %340 = vmatprep.subr.mxu0 0.0
        %341 = vmatpush1.msra.mxu0 0.0
        %342 = vmatprep.subr.mxu0 0.0
        %343 = vmatpush1.msra.mxu0 0.0
        %344 = vmatprep.subr.mxu0 0.0
        %345 = vmatpush1.msra.mxu0 0.0
        %346 = vmatprep.subr.mxu0 0.0
        %347 = vmatpush1.msra.mxu0 0.0
        %348 = vmatprep.subr.mxu0 0.0
        %349 = vmatpush1.msra.mxu0 0.0
        %350 = vmatprep.subr.mxu0 0.0
        %351 = vmatpush1.msra.mxu0 0.0
        %352 = vmatprep.subr.mxu0 0.0
        %353 = vmatpush1.msra.mxu0 0.0
        %354 = vmatprep.subr.mxu0 0.0
        %355 = vmatpush1.msra.mxu0 0.0
        %356 = vmatprep.subr.mxu0 0.0
        %357 = vmatpush1.msra.mxu0 0.0
        %358 = vmatprep.subr.mxu0 0.0
        %359 = vmatpush1.msra.mxu0 0.0
        %360 = vmatprep.subr.mxu0 0.0
        %361 = vmatpush1.msra.mxu0 0.0
        %362 = vmatprep.subr.mxu0 0.0
        %363 = vmatpush1.msra.mxu0 0.0
        %364 = vmatprep.subr.mxu0 0.0
        %365 = vmatpush1.msra.mxu0 0.0
        %366 = vmatprep.subr.mxu0 0.0
        %367 = vmatpush1.msra.mxu0 0.0
        %368 = vmatprep.subr.mxu0 0.0
        %369 = vmatpush1.msra.mxu0 0.0
        %370 = vmatprep.subr.mxu0 0.0
        %371 = vmatpush1.msra.mxu0 0.0
        %372 = vmatprep.subr.mxu0 0.0
        %373 = vmatpush1.msra.mxu0 0.0
        %374 = vmatprep.subr.mxu0 0.0
        %375 = vmatpush1.msra.mxu0 0.0
        %376 = vmatprep.subr.mxu0 0.0
        %377 = vmatpush1.msra.mxu0 0.0
        %378 = vmatprep.subr.mxu0 0.0
        %379 = vmatpush1.msra.mxu0 0.0
        %380 = vmatprep.subr.mxu0 0.0
        %381 = vmatpush1.msra.mxu0 0.0
        %382 = vmatprep.subr.mxu0 0.0
        %383 = vmatpush1.msra.mxu0 0.0
        %384 = vmatprep.subr.mxu0 0.0
        %385 = vmatpush1.msra.mxu0 0.0
        %386 = vmatprep.subr.mxu0 0.0
        %387 = vmatpush1.msra.mxu0 0.0
        %388 = vmatprep.subr.mxu0 0.0
        %389 = vmatpush1.msra.mxu0 0.0
        %390 = vmatprep.mubr.f32.mxu0 0.0
        %v391 = vand.u32 %v317, 4294901760
        %v392 = vsub.f32 %v317, %v391
        %v393 = vand.u32 %v392, 4294901760
        %v394 = vsub.f32 %v392, %v393
        %v395 = vand.u32 %v394, 4294901760
        %396 = vmatmul.mubr.f32.gmra.mrb[0].mxu0 %v395
        %v397 = vpop.f32.mrb[0].mxu0
        %v398 = vadd.f32 %v313, %v397
        %v399 = vpop.f32.mrb[0].mxu0
        %400 = vmatprep.mubr.f32.mxu0 0.0
        %v401 = vand.u32 %v320, 4294901760
        %v402 = vsub.f32 %v320, %v401
        %v403 = vand.u32 %v402, 4294901760
        %v404 = vsub.f32 %v402, %v403
        %v405 = vand.u32 %v404, 4294901760
        %406 = vmatmul.mubr.f32.gmra.mrb[0].mxu0 %v405
        %v407 = vpop.f32.mrb[0].mxu0
        %v408 = vadd.f32 %v313, %v407
        %v409 = vpop.f32.mrb[0].mxu0
        %410 = vdwg.mxu0
        %411 = vmatprep.subr.mxu0 0.0
        %v412 = vand.u32 %v304, 4294901760
        %v413 = vsub.f32 %v304, %v412
        %v414 = vand.u32 %v413, 4294901760
        %v415 = vsub.f32 %v413, %v414
        %v416 = vand.u32 %v415, 4294901760
        %417 = vmatpush1.msra.mxu0 %v416
        %418 = vmatprep.subr.mxu0 0.0
        %v419 = vand.u32 %v305, 4294901760
        %v420 = vsub.f32 %v305, %v419
        %v421 = vand.u32 %v420, 4294901760
        %v422 = vsub.f32 %v420, %v421
        %v423 = vand.u32 %v422, 4294901760
        %424 = vmatpush1.msra.mxu0 %v423
        %425 = vmatprep.subr.mxu0 0.0
        %v426 = vand.u32 %v306, 4294901760
        %v427 = vsub.f32 %v306, %v426
        %v428 = vand.u32 %v427, 4294901760
        %v429 = vsub.f32 %v427, %v428
        %v430 = vand.u32 %v429, 4294901760
        %431 = vmatpush1.msra.mxu0 %v430
        %432 = vmatprep.subr.mxu0 0.0
        %v433 = vand.u32 %v307, 4294901760
        %v434 = vsub.f32 %v307, %v433
        %v435 = vand.u32 %v434, 4294901760
        %v436 = vsub.f32 %v434, %v435
        %v437 = vand.u32 %v436, 4294901760
        %438 = vmatpush1.msra.mxu0 %v437
        %439 = vmatprep.subr.mxu0 0.0
        %440 = vmatpush1.msra.mxu0 0.0
        %441 = vmatprep.subr.mxu0 0.0
        %442 = vmatpush1.msra.mxu0 0.0
        %443 = vmatprep.subr.mxu0 0.0
        %444 = vmatpush1.msra.mxu0 0.0
        %445 = vmatprep.subr.mxu0 0.0
        %446 = vmatpush1.msra.mxu0 0.0
        %447 = vmatprep.subr.mxu0 0.0
        %448 = vmatpush1.msra.mxu0 0.0
        %449 = vmatprep.subr.mxu0 0.0
        %450 = vmatpush1.msra.mxu0 0.0
        %451 = vmatprep.subr.mxu0 0.0
        %452 = vmatpush1.msra.mxu0 0.0
        %453 = vmatprep.subr.mxu0 0.0
        %454 = vmatpush1.msra.mxu0 0.0
        %455 = vmatprep.subr.mxu0 0.0
        %456 = vmatpush1.msra.mxu0 0.0
        %457 = vmatprep.subr.mxu0 0.0
        %458 = vmatpush1.msra.mxu0 0.0
        %459 = vmatprep.subr.mxu0 0.0
        %460 = vmatpush1.msra.mxu0 0.0
        %461 = vmatprep.subr.mxu0 0.0
        %462 = vmatpush1.msra.mxu0 0.0
        %463 = vmatprep.subr.mxu0 0.0
        %464 = vmatpush1.msra.mxu0 0.0
        %465 = vmatprep.subr.mxu0 0.0
        %466 = vmatpush1.msra.mxu0 0.0
        %467 = vmatprep.subr.mxu0 0.0
        %468 = vmatpush1.msra.mxu0 0.0
        %469 = vmatprep.subr.mxu0 0.0
        %470 = vmatpush1.msra.mxu0 0.0
        %471 = vmatprep.subr.mxu0 0.0
        %472 = vmatpush1.msra.mxu0 0.0
        %473 = vmatprep.subr.mxu0 0.0
        %474 = vmatpush1.msra.mxu0 0.0
        %475 = vmatprep.subr.mxu0 0.0
        %476 = vmatpush1.msra.mxu0 0.0
        %477 = vmatprep.subr.mxu0 0.0
        %478 = vmatpush1.msra.mxu0 0.0
        %479 = vmatprep.subr.mxu0 0.0
        %480 = vmatpush1.msra.mxu0 0.0
        %481 = vmatprep.subr.mxu0 0.0
        %482 = vmatpush1.msra.mxu0 0.0
        %483 = vmatprep.subr.mxu0 0.0
        %484 = vmatpush1.msra.mxu0 0.0
        %485 = vmatprep.subr.mxu0 0.0
        %486 = vmatpush1.msra.mxu0 0.0
        %487 = vmatprep.subr.mxu0 0.0
        %488 = vmatpush1.msra.mxu0 0.0
        %489 = vmatprep.subr.mxu0 0.0
        %490 = vmatpush1.msra.mxu0 0.0
        %491 = vmatprep.subr.mxu0 0.0
        %492 = vmatpush1.msra.mxu0 0.0
        %493 = vmatprep.subr.mxu0 0.0
        %494 = vmatpush1.msra.mxu0 0.0
        %495 = vmatprep.mubr.f32.mxu0 0.0
        %v496 = vand.u32 %v317, 4294901760
        %497 = vmatmul.mubr.f32.gmra.mrb[0].mxu0 %v496
        %v498 = vpop.f32.mrb[0].mxu0
        %v499 = vadd.f32 %v398, %v498
        %v500 = vpop.f32.mrb[0].mxu0
        %501 = vmatprep.mubr.f32.mxu0 0.0
        %v502 = vand.u32 %v320, 4294901760
        %503 = vmatmul.mubr.f32.gmra.mrb[0].mxu0 %v502
        %v504 = vpop.f32.mrb[0].mxu0
        %v505 = vadd.f32 %v408, %v504
        %v506 = vpop.f32.mrb[0].mxu0
        %507 = vdwg.mxu0
        %508 = vmatprep.subr.mxu0 0.0
        %v509 = vand.u32 %v304, 4294901760
        %v510 = vsub.f32 %v304, %v509
        %511 = vmatpush1.msra.mxu0 %v510
        %512 = vmatprep.subr.mxu0 0.0
        %v513 = vand.u32 %v305, 4294901760
        %v514 = vsub.f32 %v305, %v513
        %515 = vmatpush1.msra.mxu0 %v514
        %516 = vmatprep.subr.mxu0 0.0
        %v517 = vand.u32 %v306, 4294901760
        %v518 = vsub.f32 %v306, %v517
        %519 = vmatpush1.msra.mxu0 %v518
        %520 = vmatprep.subr.mxu0 0.0
        %v521 = vand.u32 %v307, 4294901760
        %v522 = vsub.f32 %v307, %v521
        %523 = vmatpush1.msra.mxu0 %v522
        %524 = vmatprep.subr.mxu0 0.0
        %525 = vmatpush1.msra.mxu0 0.0
        %526 = vmatprep.subr.mxu0 0.0
        %527 = vmatpush1.msra.mxu0 0.0
        %528 = vmatprep.subr.mxu0 0.0
        %529 = vmatpush1.msra.mxu0 0.0
        %530 = vmatprep.subr.mxu0 0.0
        %531 = vmatpush1.msra.mxu0 0.0
        %532 = vmatprep.subr.mxu0 0.0
        %533 = vmatpush1.msra.mxu0 0.0
        %534 = vmatprep.subr.mxu0 0.0
        %535 = vmatpush1.msra.mxu0 0.0
        %536 = vmatprep.subr.mxu0 0.0
        %537 = vmatpush1.msra.mxu0 0.0
        %538 = vmatprep.subr.mxu0 0.0
        %539 = vmatpush1.msra.mxu0 0.0
        %540 = vmatprep.subr.mxu0 0.0
        %541 = vmatpush1.msra.mxu0 0.0
        %542 = vmatprep.subr.mxu0 0.0
        %543 = vmatpush1.msra.mxu0 0.0
        %544 = vmatprep.subr.mxu0 0.0
        %545 = vmatpush1.msra.mxu0 0.0
        %546 = vmatprep.subr.mxu0 0.0
        %547 = vmatpush1.msra.mxu0 0.0
        %548 = vmatprep.subr.mxu0 0.0
        %549 = vmatpush1.msra.mxu0 0.0
        %550 = vmatprep.subr.mxu0 0.0
        %551 = vmatpush1.msra.mxu0 0.0
        %552 = vmatprep.subr.mxu0 0.0
        %553 = vmatpush1.msra.mxu0 0.0
        %554 = vmatprep.subr.mxu0 0.0
        %555 = vmatpush1.msra.mxu0 0.0
        %556 = vmatprep.subr.mxu0 0.0
        %557 = vmatpush1.msra.mxu0 0.0
        %558 = vmatprep.subr.mxu0 0.0
        %559 = vmatpush1.msra.mxu0 0.0
        %560 = vmatprep.subr.mxu0 0.0
        %561 = vmatpush1.msra.mxu0 0.0
        %562 = vmatprep.subr.mxu0 0.0
        %563 = vmatpush1.msra.mxu0 0.0
        %564 = vmatprep.subr.mxu0 0.0
        %565 = vmatpush1.msra.mxu0 0.0
        %566 = vmatprep.subr.mxu0 0.0
        %567 = vmatpush1.msra.mxu0 0.0
        %568 = vmatprep.subr.mxu0 0.0
        %569 = vmatpush1.msra.mxu0 0.0
        %570 = vmatprep.subr.mxu0 0.0
        %571 = vmatpush1.msra.mxu0 0.0
        %572 = vmatprep.subr.mxu0 0.0
        %573 = vmatpush1.msra.mxu0 0.0
        %574 = vmatprep.subr.mxu0 0.0
        %575 = vmatpush1.msra.mxu0 0.0
        %576 = vmatprep.subr.mxu0 0.0
        %577 = vmatpush1.msra.mxu0 0.0
        %578 = vmatprep.subr.mxu0 0.0
        %579 = vmatpush1.msra.mxu0 0.0
        %580 = vmatprep.mubr.f32.mxu0 0.0
        %v581 = vand.u32 %v317, 4294901760
        %v582 = vsub.f32 %v317, %v581
        %583 = vmatmul.mubr.f32.gmra.mrb[0].mxu0 %v582
        %v584 = vpop.f32.mrb[0].mxu0
        %v585 = vadd.f32 %v499, %v584
        %v586 = vpop.f32.mrb[0].mxu0
        %587 = vmatprep.mubr.f32.mxu0 0.0
        %v588 = vand.u32 %v320, 4294901760
        %v589 = vsub.f32 %v320, %v588
        %590 = vmatmul.mubr.f32.gmra.mrb[0].mxu0 %v589
        %v591 = vpop.f32.mrb[0].mxu0
        %v592 = vadd.f32 %v505, %v591
        %v593 = vpop.f32.mrb[0].mxu0
        %594 = vdwg.mxu0
        %595 = vmatprep.subr.mxu0 0.0
        %v596 = vand.u32 %v304, 4294901760
        %597 = vmatpush1.msra.mxu0 %v596
        %598 = vmatprep.subr.mxu0 0.0
        %v599 = vand.u32 %v305, 4294901760
        %600 = vmatpush1.msra.mxu0 %v599
        %601 = vmatprep.subr.mxu0 0.0
        %v602 = vand.u32 %v306, 4294901760
        %603 = vmatpush1.msra.mxu0 %v602
        %604 = vmatprep.subr.mxu0 0.0
        %v605 = vand.u32 %v307, 4294901760
        %606 = vmatpush1.msra.mxu0 %v605
        %607 = vmatprep.subr.mxu0 0.0
        %608 = vmatpush1.msra.mxu0 0.0
        %609 = vmatprep.subr.mxu0 0.0
        %610 = vmatpush1.msra.mxu0 0.0
        %611 = vmatprep.subr.mxu0 0.0
        %612 = vmatpush1.msra.mxu0 0.0
        %613 = vmatprep.subr.mxu0 0.0
        %614 = vmatpush1.msra.mxu0 0.0
        %615 = vmatprep.subr.mxu0 0.0
        %616 = vmatpush1.msra.mxu0 0.0
        %617 = vmatprep.subr.mxu0 0.0
        %618 = vmatpush1.msra.mxu0 0.0
        %619 = vmatprep.subr.mxu0 0.0
        %620 = vmatpush1.msra.mxu0 0.0
        %621 = vmatprep.subr.mxu0 0.0
        %622 = vmatpush1.msra.mxu0 0.0
        %623 = vmatprep.subr.mxu0 0.0
        %624 = vmatpush1.msra.mxu0 0.0
        %625 = vmatprep.subr.mxu0 0.0
        %626 = vmatpush1.msra.mxu0 0.0
        %627 = vmatprep.subr.mxu0 0.0
        %628 = vmatpush1.msra.mxu0 0.0
        %629 = vmatprep.subr.mxu0 0.0
        %630 = vmatpush1.msra.mxu0 0.0
        %631 = vmatprep.subr.mxu0 0.0
        %632 = vmatpush1.msra.mxu0 0.0
        %633 = vmatprep.subr.mxu0 0.0
        %634 = vmatpush1.msra.mxu0 0.0
        %635 = vmatprep.subr.mxu0 0.0
        %636 = vmatpush1.msra.mxu0 0.0
        %637 = vmatprep.subr.mxu0 0.0
        %638 = vmatpush1.msra.mxu0 0.0
        %639 = vmatprep.subr.mxu0 0.0
        %640 = vmatpush1.msra.mxu0 0.0
        %641 = vmatprep.subr.mxu0 0.0
        %642 = vmatpush1.msra.mxu0 0.0
        %643 = vmatprep.subr.mxu0 0.0
        %644 = vmatpush1.msra.mxu0 0.0
        %645 = vmatprep.subr.mxu0 0.0
        %646 = vmatpush1.msra.mxu0 0.0
        %647 = vmatprep.subr.mxu0 0.0
        %648 = vmatpush1.msra.mxu0 0.0
        %649 = vmatprep.subr.mxu0 0.0
        %650 = vmatpush1.msra.mxu0 0.0
        %651 = vmatprep.subr.mxu0 0.0
        %652 = vmatpush1.msra.mxu0 0.0
        %653 = vmatprep.subr.mxu0 0.0
        %654 = vmatpush1.msra.mxu0 0.0
        %655 = vmatprep.subr.mxu0 0.0
        %656 = vmatpush1.msra.mxu0 0.0
        %657 = vmatprep.subr.mxu0 0.0
        %658 = vmatpush1.msra.mxu0 0.0
        %659 = vmatprep.subr.mxu0 0.0
        %660 = vmatpush1.msra.mxu0 0.0
        %661 = vmatprep.subr.mxu0 0.0
        %662 = vmatpush1.msra.mxu0 0.0
        %663 = vmatprep.mubr.f32.mxu0 0.0
        %v664 = vand.u32 %v317, 4294901760
        %v665 = vsub.f32 %v317, %v664
        %v666 = vand.u32 %v665, 4294901760
        %667 = vmatmul.mubr.f32.gmra.mrb[0].mxu0 %v666
        %v668 = vpop.f32.mrb[0].mxu0
        %v669 = vadd.f32 %v585, %v668
        %v670 = vpop.f32.mrb[0].mxu0
        %671 = vmatprep.mubr.f32.mxu0 0.0
        %v672 = vand.u32 %v320, 4294901760
        %v673 = vsub.f32 %v320, %v672
        %v674 = vand.u32 %v673, 4294901760
        %675 = vmatmul.mubr.f32.gmra.mrb[0].mxu0 %v674
        %v676 = vpop.f32.mrb[0].mxu0
        %v677 = vadd.f32 %v592, %v676
        %v678 = vpop.f32.mrb[0].mxu0
        %679 = vdwg.mxu0
        %680 = vmatprep.subr.mxu0 0.0
        %v681 = vand.u32 %v304, 4294901760
        %v682 = vsub.f32 %v304, %v681
        %v683 = vand.u32 %v682, 4294901760
        %684 = vmatpush1.msra.mxu0 %v683
        %685 = vmatprep.subr.mxu0 0.0
        %v686 = vand.u32 %v305, 4294901760
        %v687 = vsub.f32 %v305, %v686
        %v688 = vand.u32 %v687, 4294901760
        %689 = vmatpush1.msra.mxu0 %v688
        %690 = vmatprep.subr.mxu0 0.0
        %v691 = vand.u32 %v306, 4294901760
        %v692 = vsub.f32 %v306, %v691
        %v693 = vand.u32 %v692, 4294901760
        %694 = vmatpush1.msra.mxu0 %v693
        %695 = vmatprep.subr.mxu0 0.0
        %v696 = vand.u32 %v307, 4294901760
        %v697 = vsub.f32 %v307, %v696
        %v698 = vand.u32 %v697, 4294901760
        %699 = vmatpush1.msra.mxu0 %v698
        %700 = vmatprep.subr.mxu0 0.0
        %701 = vmatpush1.msra.mxu0 0.0
        %702 = vmatprep.subr.mxu0 0.0
        %703 = vmatpush1.msra.mxu0 0.0
        %704 = vmatprep.subr.mxu0 0.0
        %705 = vmatpush1.msra.mxu0 0.0
        %706 = vmatprep.subr.mxu0 0.0
        %707 = vmatpush1.msra.mxu0 0.0
        %708 = vmatprep.subr.mxu0 0.0
        %709 = vmatpush1.msra.mxu0 0.0
        %710 = vmatprep.subr.mxu0 0.0
        %711 = vmatpush1.msra.mxu0 0.0
        %712 = vmatprep.subr.mxu0 0.0
        %713 = vmatpush1.msra.mxu0 0.0
        %714 = vmatprep.subr.mxu0 0.0
        %715 = vmatpush1.msra.mxu0 0.0
        %716 = vmatprep.subr.mxu0 0.0
        %717 = vmatpush1.msra.mxu0 0.0
        %718 = vmatprep.subr.mxu0 0.0
        %719 = vmatpush1.msra.mxu0 0.0
        %720 = vmatprep.subr.mxu0 0.0
        %721 = vmatpush1.msra.mxu0 0.0
        %722 = vmatprep.subr.mxu0 0.0
        %723 = vmatpush1.msra.mxu0 0.0
        %724 = vmatprep.subr.mxu0 0.0
        %725 = vmatpush1.msra.mxu0 0.0
        %726 = vmatprep.subr.mxu0 0.0
        %727 = vmatpush1.msra.mxu0 0.0
        %728 = vmatprep.subr.mxu0 0.0
        %729 = vmatpush1.msra.mxu0 0.0
        %730 = vmatprep.subr.mxu0 0.0
        %731 = vmatpush1.msra.mxu0 0.0
        %732 = vmatprep.subr.mxu0 0.0
        %733 = vmatpush1.msra.mxu0 0.0
        %734 = vmatprep.subr.mxu0 0.0
        %735 = vmatpush1.msra.mxu0 0.0
        %736 = vmatprep.subr.mxu0 0.0
        %737 = vmatpush1.msra.mxu0 0.0
        %738 = vmatprep.subr.mxu0 0.0
        %739 = vmatpush1.msra.mxu0 0.0
        %740 = vmatprep.subr.mxu0 0.0
        %741 = vmatpush1.msra.mxu0 0.0
        %742 = vmatprep.subr.mxu0 0.0
        %743 = vmatpush1.msra.mxu0 0.0
        %744 = vmatprep.subr.mxu0 0.0
        %745 = vmatpush1.msra.mxu0 0.0
        %746 = vmatprep.subr.mxu0 0.0
        %747 = vmatpush1.msra.mxu0 0.0
        %748 = vmatprep.subr.mxu0 0.0
        %749 = vmatpush1.msra.mxu0 0.0
        %750 = vmatprep.subr.mxu0 0.0
        %751 = vmatpush1.msra.mxu0 0.0
        %752 = vmatprep.subr.mxu0 0.0
        %753 = vmatpush1.msra.mxu0 0.0
        %754 = vmatprep.subr.mxu0 0.0
        %755 = vmatpush1.msra.mxu0 0.0
        %756 = vmatprep.mubr.f32.mxu0 0.0
        %v757 = vand.u32 %v317, 4294901760
        %758 = vmatmul.mubr.f32.gmra.mrb[0].mxu0 %v757
        %v759 = vpop.f32.mrb[0].mxu0
        %v760 = vadd.f32 %v669, %v759
        %v761 = vpop.f32.mrb[0].mxu0
        %762 = vmatprep.mubr.f32.mxu0 0.0
        %v763 = vand.u32 %v320, 4294901760
        %764 = vmatmul.mubr.f32.gmra.mrb[0].mxu0 %v763
        %v765 = vpop.f32.mrb[0].mxu0
        %v766 = vadd.f32 %v677, %v765
        %v767 = vpop.f32.mrb[0].mxu0
        %768 = vdwg.mxu0
        %769 = vmatprep.subr.mxu0 0.0
        %v770 = vand.u32 %v304, 4294901760
        %771 = vmatpush1.msra.mxu0 %v770
        %772 = vmatprep.subr.mxu0 0.0
        %v773 = vand.u32 %v305, 4294901760
        %774 = vmatpush1.msra.mxu0 %v773
        %775 = vmatprep.subr.mxu0 0.0
        %v776 = vand.u32 %v306, 4294901760
        %777 = vmatpush1.msra.mxu0 %v776
        %778 = vmatprep.subr.mxu0 0.0
        %v779 = vand.u32 %v307, 4294901760
        %780 = vmatpush1.msra.mxu0 %v779
        %781 = vmatprep.subr.mxu0 0.0
        %782 = vmatpush1.msra.mxu0 0.0
        %783 = vmatprep.subr.mxu0 0.0
        %784 = vmatpush1.msra.mxu0 0.0
        %785 = vmatprep.subr.mxu0 0.0
        %786 = vmatpush1.msra.mxu0 0.0
        %787 = vmatprep.subr.mxu0 0.0
        %788 = vmatpush1.msra.mxu0 0.0
        %789 = vmatprep.subr.mxu0 0.0
        %790 = vmatpush1.msra.mxu0 0.0
        %791 = vmatprep.subr.mxu0 0.0
        %792 = vmatpush1.msra.mxu0 0.0
        %793 = vmatprep.subr.mxu0 0.0
        %794 = vmatpush1.msra.mxu0 0.0
        %795 = vmatprep.subr.mxu0 0.0
        %796 = vmatpush1.msra.mxu0 0.0
        %797 = vmatprep.subr.mxu0 0.0
        %798 = vmatpush1.msra.mxu0 0.0
        %799 = vmatprep.subr.mxu0 0.0
        %800 = vmatpush1.msra.mxu0 0.0
        %801 = vmatprep.subr.mxu0 0.0
        %802 = vmatpush1.msra.mxu0 0.0
        %803 = vmatprep.subr.mxu0 0.0
        %804 = vmatpush1.msra.mxu0 0.0
        %805 = vmatprep.subr.mxu0 0.0
        %806 = vmatpush1.msra.mxu0 0.0
        %807 = vmatprep.subr.mxu0 0.0
        %808 = vmatpush1.msra.mxu0 0.0
        %809 = vmatprep.subr.mxu0 0.0
        %810 = vmatpush1.msra.mxu0 0.0
        %811 = vmatprep.subr.mxu0 0.0
        %812 = vmatpush1.msra.mxu0 0.0
        %813 = vmatprep.subr.mxu0 0.0
        %814 = vmatpush1.msra.mxu0 0.0
        %815 = vmatprep.subr.mxu0 0.0
        %816 = vmatpush1.msra.mxu0 0.0
        %817 = vmatprep.subr.mxu0 0.0
        %818 = vmatpush1.msra.mxu0 0.0
        %819 = vmatprep.subr.mxu0 0.0
        %820 = vmatpush1.msra.mxu0 0.0
        %821 = vmatprep.subr.mxu0 0.0
        %822 = vmatpush1.msra.mxu0 0.0
        %823 = vmatprep.subr.mxu0 0.0
        %824 = vmatpush1.msra.mxu0 0.0
        %825 = vmatprep.subr.mxu0 0.0
        %826 = vmatpush1.msra.mxu0 0.0
        %827 = vmatprep.subr.mxu0 0.0
        %828 = vmatpush1.msra.mxu0 0.0
        %829 = vmatprep.subr.mxu0 0.0
        %830 = vmatpush1.msra.mxu0 0.0
        %831 = vmatprep.subr.mxu0 0.0
        %832 = vmatpush1.msra.mxu0 0.0
        %833 = vmatprep.subr.mxu0 0.0
        %834 = vmatpush1.msra.mxu0 0.0
        %835 = vmatprep.subr.mxu0 0.0
        %836 = vmatpush1.msra.mxu0 0.0
        %837 = vmatprep.mubr.f32.mxu0 0.0
        %v838 = vand.u32 %v317, 4294901760
        %839 = vmatmul.mubr.f32.gmra.mrb[0].mxu0 %v838
        %v840 = vpop.f32.mrb[0].mxu0
        %v841 = vadd.f32 %v760, %v840
        %v842 = vpop.f32.mrb[0].mxu0
        %843 = vmatprep.mubr.f32.mxu0 0.0
        %v844 = vand.u32 %v320, 4294901760
        %845 = vmatmul.mubr.f32.gmra.mrb[0].mxu0 %v844
        %v846 = vpop.f32.mrb[0].mxu0
        %v847 = vadd.f32 %v766, %v846
        %v848 = vpop.f32.mrb[0].mxu0
        %849 = vdwg.mxu0
        %850 = vst.msk [vmem:[%s283] sm:$0xff] %vm315, %v841
        %851 = vst.msk [vmem:[%s283 + $0x8] sm:$0xff] %vm315, %v847
        %854 = vrot.lane.b32.xlu0 %v841, 96
        %v855 = vpop.permute.xlu0 %854
        %856 = vrot.lane.b32.xlu0 %v847, 96
        %v857 = vpop.permute.xlu0 %856
        %860 = vst.msk [vmem:[%s290] sm:$0xff] %vm315, %v855
        %861 = vst.msk [vmem:[%s290 + $0x8] sm:$0xff] %vm315, %v857
        %862 = vrot.lane.b32.xlu0 %v841, 64
        %v863 = vpop.permute.xlu0 %862
        %864 = vrot.lane.b32.xlu0 %v847, 64
        %v865 = vpop.permute.xlu0 %864
        %868 = vst.msk [vmem:[%s297] sm:$0xff] %vm315, %v863
        %869 = vst.msk [vmem:[%s297 + $0x8] sm:$0xff] %vm315, %v865
        %s870 = sand.u32 %s119, 1
        %s871 = scalar_lea.sflag [#allocation4], %s870
        %s872 = sand.u32 %s119, 1
        %s873 = smul.addr %s872, 16
        %s874 = scalar_lea.vmem [#allocation7], %s873
        %s875 = sand.u32 %s27, 1
        %s876 = scalar_lea.sflag [#allocation9], %s875
        %s877 = sand.u32 %s147, 1
        %s878 = smul.addr %s877, 16
        %s879 = scalar_lea.vmem [#allocation8], %s878
        %s880 = sand.u32 %s27, 1
        %s881 = scalar_lea.sflag [#allocation9], %s880
        %s882 = sand.u32 %s175, 1
        %s883 = smul.addr %s882, 16
        %s884 = scalar_lea.vmem [#allocation10], %s883
        // Predicated region
        $region41: #{tpu_custom_call.1} parent=31 // pred_check
          %p885 = pneg %p129
        $region42: #{tpu_custom_call.1} parent=31 // pred_check_branch
          %887 = sbr.rel (%p885) target = $region44
        $region43: #{tpu_custom_call.1} parent=31 // pred_region
          %s888 = smul.u32 2, %s32
          %s890 = ssub.s32 256, 256
          %891 = vsyncadd %s871, %s890
          %s892 = smul.addr %s31, 2
          %s893 = sadd.s32 %s888, %s892
          %s894 = smul.addr %s893, 128
          %s895 = scalar_lea.hbm %s3, %s894
          %s896 = sshll.u32 %s874, 4
          %s897 = int_to_ptr.vmem [resolvable:$true] %s896
          %902 = dma.vmem_to_hbm [thread:$0]  %s897, 256, %s895, %s871, 128, 128, 8
        $region44: #{tpu_custom_call.1} parent=31 // pred_fallthru
          _
        // Predicated region
        $region45: #{tpu_custom_call.1} parent=31 // pred_check
          %p903 = pneg %p157
        $region46: #{tpu_custom_call.1} parent=31 // pred_check_branch
          %905 = sbr.rel (%p903) target = $region48
        $region47: #{tpu_custom_call.1} parent=31 // pred_region
          %s906 = smul.u32 2, %s32
          %s908 = ssub.s32 256, 256
          %909 = vsyncadd %s876, %s908
          %s910 = smul.addr %s31, 2
          %s911 = sadd.s32 %s906, %s910
          %s912 = smul.addr %s911, 128
          %s913 = scalar_lea.hbm %s4, %s912
          %s914 = sshll.u32 %s879, 4
          %s915 = int_to_ptr.vmem [resolvable:$true] %s914
          %920 = dma.vmem_to_hbm [thread:$0]  %s915, 256, %s913, %s876, 128, 128, 8
        $region48: #{tpu_custom_call.1} parent=31 // pred_fallthru
          _
        // Predicated region
        $region49: #{tpu_custom_call.1} parent=31 // pred_check
          %p921 = pneg %p185
        $region50: #{tpu_custom_call.1} parent=31 // pred_check_branch
          %923 = sbr.rel (%p921) target = $region52
        $region51: #{tpu_custom_call.1} parent=31 // pred_region
          %s924 = smul.u32 2, %s32
          %s926 = ssub.s32 256, 256
          %927 = vsyncadd %s881, %s926
          %s928 = smul.addr %s31, 2
          %s929 = sadd.s32 %s924, %s928
          %s930 = smul.addr %s929, 128
          %s931 = scalar_lea.hbm %s5, %s930
          %s932 = sshll.u32 %s884, 4
          %s933 = int_to_ptr.vmem [resolvable:$true] %s932
          %938 = dma.vmem_to_hbm [thread:$0]  %s933, 256, %s931, %s881, 128, 128, 8
        $region52: #{tpu_custom_call.1} parent=31 // pred_fallthru
          _
      $region32: #{tpu_custom_call.1} parent=5 // pred_fallthru
        _
      %p939 = scmp.le.s32.totalorder 2, %s22
      // Predicated region
      $region53: #{tpu_custom_call.1} parent=5 // pred_check
        %p940 = pneg %p939
      $region54: #{tpu_custom_call.1} parent=5 // pred_check_branch
        %942 = sbr.rel (%p940) target = $region56
      $region55: #{tpu_custom_call.1} parent=5 // pred_region
        %s943 = ssub.s32 %s22, 2
        // Predicated region
        $region57: #{tpu_custom_call.1} parent=55 // pred_check
          %p944 = pneg %p135
        $region58: #{tpu_custom_call.1} parent=55 // pred_check_branch
          %946 = sbr.rel (%p944) target = $region60
        $region59: #{tpu_custom_call.1} parent=55 // pred_region
          %s947 = sand.u32 %s120, 1
          %s948 = scalar_lea.sflag [#allocation4], %s947
          %s949 = sand.u32 %s120, 1
          %s950 = smul.addr %s949, 16
          %s951 = scalar_lea.vmem [#allocation7], %s950
          %952 = dma.done %s948, 256
        $region60: #{tpu_custom_call.1} parent=55 // pred_fallthru
          _
        // Predicated region
        $region61: #{tpu_custom_call.1} parent=55 // pred_check
          %p953 = pneg %p163
        $region62: #{tpu_custom_call.1} parent=55 // pred_check_branch
          %955 = sbr.rel (%p953) target = $region64
        $region63: #{tpu_custom_call.1} parent=55 // pred_region
          %s956 = sand.u32 %s28, 1
          %s957 = scalar_lea.sflag [#allocation9], %s956
          %s958 = sand.u32 %s148, 1
          %s959 = smul.addr %s958, 16
          %s960 = scalar_lea.vmem [#allocation8], %s959
          %961 = dma.done %s957, 256
        $region64: #{tpu_custom_call.1} parent=55 // pred_fallthru
          _
        // Predicated region
        $region65: #{tpu_custom_call.1} parent=55 // pred_check
          %p962 = pneg %p191
        $region66: #{tpu_custom_call.1} parent=55 // pred_check_branch
          %964 = sbr.rel (%p962) target = $region68
        $region67: #{tpu_custom_call.1} parent=55 // pred_region
          %s965 = sand.u32 %s28, 1
          %s966 = scalar_lea.sflag [#allocation9], %s965
          %s967 = sand.u32 %s176, 1
          %s968 = smul.addr %s967, 16
          %s969 = scalar_lea.vmem [#allocation10], %s968
          %970 = dma.done %s966, 256
        $region68: #{tpu_custom_call.1} parent=55 // pred_fallthru
          _
      $region56: #{tpu_custom_call.1} parent=5 // pred_fallthru
        _
    $region6: #{tpu_custom_call.1} parent=1 // loop_footer
      %s26 = sadd.s32 1, %s22
    $region7: #{tpu_custom_call.1} parent=1 // loop_footer_branch
      %21 = sbr.rel target = $region3
    $region8: #{tpu_custom_call.1} parent=1 // loop_exit
      _
    %971 = vsyncpa [#allocation3], 1
    %s972 = scalar_lea.sflag [#allocation3], 1
    %973 = vsyncpa %s972, 1
    %974 = vsyncpa [#allocation6], 1
    %975 = vsyncpa [#allocation4], 1
    %s976 = scalar_lea.sflag [#allocation4], 1
    %977 = vsyncpa %s976, 1
    %978 = vsyncpa [#allocation9], 1
    %s979 = scalar_lea.sflag [#allocation9], 1
    %980 = vsyncpa %s979, 1

</llo_original>
